<compile_context>
chip_gen: v7x
topology: tpu7x:2x2x1
jax: 0.10.0
libtpu: 0.0.40
codegen_flags: <defaults>
</compile_context>

<pallas_src>
import numpy as np
import jax
import jax.numpy as jnp
from jax.experimental import pallas as pl
from jax.experimental.pallas import tpu as pltpu

IN_DIM = 2                 # PointMaze observation dim (2-D position)
HIDDEN = 128
ACTION_DIM = 2             # env.action_space.shape[0] (2-D velocity)
HEADS = ACTION_DIM + 1     # fused actor (2) + critic (1) output rows
ACTION_STD = 0.01
TILE_B = 512               # batch tile (lane axis); fits v5e/v6e/v7x VMEM easily
SMALL_BATCH_CUTOFF = 256   # below this, plain XLA beats a Pallas launch


def _policy_kernel(xT_ref, w1_ref, b1_ref, wh_ref, bh_ref, outT_ref):
    """One batch tile: VPU first layer + fused MXU head, lane-dense stores.

    xT_ref  : (IN_DIM, TILE_B)   observations, transposed
    w1_ref  : (HIDDEN, IN_DIM)   affine1 weight (PyTorch (out,in) layout)
    b1_ref  : (HIDDEN, 1)        affine1 bias
    wh_ref  : (HEADS, HIDDEN)    [action_mean ; value_head] weights
    bh_ref  : (HEADS, 1)         [action_mean ; value_head] biases
    outT_ref: (HEADS, TILE_B)    [mean_rows ; value_row], transposed
    """
    # First layer: K=2 contraction as broadcast outer products on the VPU.
    acc = w1_ref[:, 0:1] * xT_ref[0:1, :]              # (HIDDEN, TILE_B)
    for d in range(1, IN_DIM):
        acc = acc + w1_ref[:, d:d + 1] * xT_ref[d:d + 1, :]
    h = jnp.maximum(acc + b1_ref[...], 0.0)            # (HIDDEN, TILE_B)

    # Fused actor + critic head on the MXU: (HEADS,HIDDEN) @ (HIDDEN,TILE_B).
    out = jnp.dot(wh_ref[...], h, preferred_element_type=jnp.float32)
    outT_ref[...] = out + bh_ref[...]                  # (HEADS, TILE_B)


def _pallas_policy(x, params, tile_b=TILE_B):
    """Batched rollout path: tiled, pipelined Pallas kernel."""
    B = x.shape[0]
    num_tiles = pl.cdiv(B, tile_b)
    b_pad = num_tiles * tile_b

    xT = x.T                                            # (IN_DIM, B)
    if b_pad != B:
        xT = jnp.pad(xT, ((0, 0), (0, b_pad - B)))      # zero-pad last tile

    outT = pl.pallas_call(
        _policy_kernel,
        out_shape=jax.ShapeDtypeStruct((HEADS, b_pad), jnp.float32),
        grid_spec=pltpu.PrefetchScalarGridSpec(
            num_scalar_prefetch=0,
            grid=(num_tiles,),
            in_specs=[
                pl.BlockSpec((IN_DIM, tile_b), lambda i: (0, i)),   # x tile
                pl.BlockSpec((HIDDEN, IN_DIM), lambda i: (0, 0)),   # w1 (resident)
                pl.BlockSpec((HIDDEN, 1), lambda i: (0, 0)),        # b1 (resident)
                pl.BlockSpec((HEADS, HIDDEN), lambda i: (0, 0)),    # fused head W
                pl.BlockSpec((HEADS, 1), lambda i: (0, 0)),         # fused head b
            ],
            out_specs=pl.BlockSpec((HEADS, tile_b), lambda i: (0, i)),
        ),
        compiler_params=pltpu.CompilerParams(
            dimension_semantics=("parallel",),   # megacore sharding on v7x
        ),
    )(xT, params["w1"], params["b1"], params["w_heads"], params["b_heads"])

    out = outT[:, :B].T                                 # (B, HEADS)
    return out[:, :ACTION_DIM], out[:, ACTION_DIM:]


def _xla_policy(x, params):
    """Small/interactive-batch path: let XLA fuse the whole tiny MLP."""
    h = jnp.maximum(x @ params["w1"].T + params["b1"].T, 0.0)
    out = h @ params["w_heads"].T + params["b_heads"].T
    return out[:, :ACTION_DIM], out[:, ACTION_DIM:]


def policy_forward(x, params, *, use_pallas=None):
    """Actor-critic forward.

    Returns (action_mean, action_std, state_value); (mean, std) fully
    parameterize the Normal distribution of the PyTorch module.
    """
    B = x.shape[0]
    if use_pallas is None:
        use_pallas = B >= SMALL_BATCH_CUTOFF
    if use_pallas:
        mean, value = _pallas_policy(x, params)
    else:
        mean, value = _xla_policy(x, params)
    action_std = jnp.full((1,), ACTION_STD, dtype=jnp.float32)
    # TODO(synk): torch.distributions.Normal has no Pallas equivalent; we
    # return (mean, std) which fully parameterizes it.
    return mean, action_std, value


def init_params(key):
    """PyTorch nn.Linear default init: U[-1/sqrt(fan_in), +1/sqrt(fan_in)].

    Weights are stored in PyTorch (out_features, in_features) layout, which is
    exactly the transposed/lane-dense layout the kernel wants. The two head
    layers are pre-fused into a single (HEADS, HIDDEN) weight / (HEADS, 1) bias.
    """
    k1, k2, k3, k4, k5, k6 = jax.random.split(key, 6)

    def uniform(k, shape, fan_in):
        bound = 1.0 / jnp.sqrt(jnp.float32(fan_in))
        return jax.random.uniform(k, shape, jnp.float32, -bound, bound)

    w1 = uniform(k1, (HIDDEN, IN_DIM), IN_DIM)
    b1 = uniform(k2, (HIDDEN, 1), IN_DIM)
    wa = uniform(k3, (ACTION_DIM, HIDDEN), HIDDEN)   # action_mean.weight
    ba = uniform(k4, (ACTION_DIM, 1), HIDDEN)        # action_mean.bias
    wv = uniform(k5, (1, HIDDEN), HIDDEN)            # value_head.weight
    bv = uniform(k6, (1, 1), HIDDEN)                 # value_head.bias
    return {
        "w1": w1,
        "b1": b1,
        "w_heads": jnp.concatenate([wa, wv], axis=0),   # (HEADS, HIDDEN)
        "b_heads": jnp.concatenate([ba, bv], axis=0),   # (HEADS, 1)
    }


def _numpy_reference(x, params):
    """float64 numpy reference of the PyTorch forward."""
    xf = np.asarray(x, np.float64)
    w1 = np.asarray(params["w1"], np.float64)
    b1 = np.asarray(params["b1"], np.float64)
    wh = np.asarray(params["w_heads"], np.float64)
    bh = np.asarray(params["b_heads"], np.float64)
    h = np.maximum(xf @ w1.T + b1.T, 0.0)
    out = h @ wh.T + bh.T
    return out[:, :ACTION_DIM], out[:, ACTION_DIM:]


if __name__ == "__main__":
    key = jax.random.PRNGKey(0)
    pkey, xkey_big, xkey_small = jax.random.split(key, 3)
    params = init_params(pkey)

    fwd = jax.jit(policy_forward, static_argnames=("use_pallas",))

    # --- Batched rollout path: exercises the Pallas kernel (incl. padding,
    #     B=600 is not a multiple of TILE_B=512 -> 2 grid steps, last padded).
    B_big = 600
    x_big = jax.random.normal(xkey_big, (B_big, IN_DIM), dtype=jnp.float32)
    mean_b, std_b, value_b = fwd(x_big, params, use_pallas=True)
    jax.block_until_ready((mean_b, std_b, value_b))

    assert mean_b.shape == (B_big, ACTION_DIM) and value_b.shape == (B_big, 1)
    mean_ref, value_ref = _numpy_reference(x_big, params)
    np.testing.assert_allclose(np.asarray(mean_b), mean_ref, rtol=2e-3, atol=2e-3)
    np.testing.assert_allclose(np.asarray(value_b), value_ref, rtol=2e-3, atol=2e-3)

    # --- Small interactive path (B=8): dispatches to the plain-XLA fallback.
    B_small = 8
    x_small = jax.random.normal(xkey_small, (B_small, IN_DIM), dtype=jnp.float32)
    mean_s, std_s, value_s = fwd(x_small, params)
    jax.block_until_ready((mean_s, std_s, value_s))

    assert mean_s.shape == (B_small, ACTION_DIM) and value_s.shape == (B_small, 1)
    mean_ref_s, value_ref_s = _numpy_reference(x_small, params)
    np.testing.assert_allclose(np.asarray(mean_s), mean_ref_s, rtol=2e-3, atol=2e-3)
    np.testing.assert_allclose(np.asarray(value_s), value_ref_s, rtol=2e-3, atol=2e-3)

    # Constant std (compare in float32 — 0.01 is not exactly representable).
    assert abs(float(std_b[0]) - ACTION_STD) < 1e-6
    assert abs(float(std_s[0]) - ACTION_STD) < 1e-6

    print("KERNEL_OK")
</pallas_src>

<mosaic_0001>
module attributes {stable_mosaic.version = 11 : i64} {
  func.func @_policy_kernel(%arg0: i32, %arg1: memref<2x512xf32, #tpu.memory_space<vmem>>, %arg2: memref<128x2xf32, #tpu.memory_space<vmem>>, %arg3: memref<128x1xf32, #tpu.memory_space<vmem>>, %arg4: memref<3x128xf32, #tpu.memory_space<vmem>>, %arg5: memref<3x1xf32, #tpu.memory_space<vmem>>, %arg6: memref<3x512xf32, #tpu.memory_space<vmem>>) attributes {dimension_semantics = [#tpu.dimension_semantics<parallel>], iteration_bounds = array<i64: 2>, scalar_prefetch = 0 : i64, scratch_operands = 0 : i64, tpu.core_type = #tpu.core_type<tc>, window_params = [{transform_indices = @transform_0, window_bounds = array<i64: 2, 512>}, {pipeline_mode = #tpu.pipeline_mode<synchronous>, transform_indices = @transform_1, window_bounds = array<i64: 128, 2>}, {pipeline_mode = #tpu.pipeline_mode<synchronous>, transform_indices = @transform_2, window_bounds = array<i64: 128, 1>}, {pipeline_mode = #tpu.pipeline_mode<synchronous>, transform_indices = @transform_3, window_bounds = array<i64: 3, 128>}, {pipeline_mode = #tpu.pipeline_mode<synchronous>, transform_indices = @transform_4, window_bounds = array<i64: 3, 1>}, {transform_indices = @transform_5, window_bounds = array<i64: 3, 512>}]} {
    %c0 = arith.constant 0 : index
    %c0_0 = arith.constant 0 : index
    %0 = vector.load %arg2[%c0, %c0_0] : memref<128x2xf32, #tpu.memory_space<vmem>>, vector<128x1xf32>
    %c0_1 = arith.constant 0 : index
    %c0_2 = arith.constant 0 : index
    %1 = vector.load %arg1[%c0_1, %c0_2] : memref<2x512xf32, #tpu.memory_space<vmem>>, vector<1x512xf32>
    %2 = vector.broadcast %0 : vector<128x1xf32> to vector<128x512xf32>
    %3 = vector.broadcast %1 : vector<1x512xf32> to vector<128x512xf32>
    %4 = arith.mulf %2, %3 : vector<128x512xf32>
    %c0_3 = arith.constant 0 : index
    %c1 = arith.constant 1 : index
    %5 = vector.load %arg2[%c0_3, %c1] : memref<128x2xf32, #tpu.memory_space<vmem>>, vector<128x1xf32>
    %c1_4 = arith.constant 1 : index
    %c0_5 = arith.constant 0 : index
    %6 = vector.load %arg1[%c1_4, %c0_5] : memref<2x512xf32, #tpu.memory_space<vmem>>, vector<1x512xf32>
    %7 = vector.broadcast %5 : vector<128x1xf32> to vector<128x512xf32>
    %8 = vector.broadcast %6 : vector<1x512xf32> to vector<128x512xf32>
    %9 = arith.mulf %7, %8 : vector<128x512xf32>
    %10 = arith.addf %4, %9 : vector<128x512xf32>
    %c0_6 = arith.constant 0 : index
    %c0_7 = arith.constant 0 : index
    %11 = vector.load %arg3[%c0_6, %c0_7] : memref<128x1xf32, #tpu.memory_space<vmem>>, vector<128x1xf32>
    %12 = vector.broadcast %11 : vector<128x1xf32> to vector<128x512xf32>
    %13 = arith.addf %10, %12 : vector<128x512xf32>
    %cst = arith.constant 0.000000e+00 : f32
    %14 = vector.broadcast %cst : f32 to vector<128x512xf32>
    %15 = arith.maximumf %13, %14 : vector<128x512xf32>
    %c0_8 = arith.constant 0 : index
    %c0_9 = arith.constant 0 : index
    %16 = vector.load %arg4[%c0_8, %c0_9] : memref<3x128xf32, #tpu.memory_space<vmem>>, vector<3x128xf32>
    %cst_10 = arith.constant dense<0.000000e+00> : vector<3x512xf32>
    %17 = tpu.matmul %16, %15, %cst_10 {dimension_numbers = #tpu.dot_dimension_numbers<[1], [0], [0], [1], [0, 0, 1, 1], [], []>} : vector<3x128xf32>, vector<128x512xf32>, vector<3x512xf32> -> vector<3x512xf32>
    %c0_11 = arith.constant 0 : index
    %c0_12 = arith.constant 0 : index
    %18 = vector.load %arg5[%c0_11, %c0_12] : memref<3x1xf32, #tpu.memory_space<vmem>>, vector<3x1xf32>
    %19 = vector.broadcast %18 : vector<3x1xf32> to vector<3x512xf32>
    %20 = arith.addf %17, %19 : vector<3x512xf32>
    %c0_13 = arith.constant 0 : index
    %c0_14 = arith.constant 0 : index
    %21 = vector.load %arg6[%c0_13, %c0_14] : memref<3x512xf32, #tpu.memory_space<vmem>>, vector<3x512xf32>
    tpu.vector_store %arg6[%c0_13, %c0_14], %20 {strides = array<i32>} : memref<3x512xf32, #tpu.memory_space<vmem>>, vector<3x512xf32>,
    return
  }
  func.func @transform_0(%arg0: i32) -> (i32, i32) {
    %c0_i32 = arith.constant 0 : i32
    %c0_i32_0 = arith.constant 0 : i32
    return %c0_i32, %arg0 : i32, i32
  }
  func.func @transform_1(%arg0: i32) -> (i32, i32) {
    %c0_i32 = arith.constant 0 : i32
    %c0_i32_0 = arith.constant 0 : i32
    %c0_i32_1 = arith.constant 0 : i32
    return %c0_i32, %c0_i32_0 : i32, i32
  }
  func.func @transform_2(%arg0: i32) -> (i32, i32) {
    %c0_i32 = arith.constant 0 : i32
    %c0_i32_0 = arith.constant 0 : i32
    %c0_i32_1 = arith.constant 0 : i32
    return %c0_i32, %c0_i32_0 : i32, i32
  }
  func.func @transform_3(%arg0: i32) -> (i32, i32) {
    %c0_i32 = arith.constant 0 : i32
    %c0_i32_0 = arith.constant 0 : i32
    %c0_i32_1 = arith.constant 0 : i32
    return %c0_i32, %c0_i32_0 : i32, i32
  }
  func.func @transform_4(%arg0: i32) -> (i32, i32) {
    %c0_i32 = arith.constant 0 : i32
    %c0_i32_0 = arith.constant 0 : i32
    %c0_i32_1 = arith.constant 0 : i32
    return %c0_i32, %c0_i32_0 : i32, i32
  }
  func.func @transform_5(%arg0: i32) -> (i32, i32) {
    %c0_i32 = arith.constant 0 : i32
    %c0_i32_0 = arith.constant 0 : i32
    return %c0_i32, %arg0 : i32, i32
  }
}

</mosaic_0001>

<llo_original>
// kernel: policy_forward.1
$region0: #{policy_forward.1}
  #allocation0 [shape = 'u32[]', space=smem, size = 0x4, offset = 0x4, fixed_abs, tag = 'smem constant byte address 0x4 - core index']
  #allocation1 [shape = 'u32[144,128]{1,0:T(1,128)}', space=vmem, size = 0x12000, scoped, tag = 'internal scratch']
  %s0 = inlined_call_operand.vmem [shape: f32[2,1024], index: 0, kind: input, shape index: {}]
  %s1 = inlined_call_operand.vmem [shape: f32[128,2], index: 1, kind: input, shape index: {}]
  %s2 = inlined_call_operand.vmem [shape: f32[128,1], index: 2, kind: input, shape index: {}]
  %s3 = inlined_call_operand.vmem [shape: f32[3,128], index: 3, kind: input, shape index: {}]
  %s4 = inlined_call_operand.vmem [shape: f32[3,1], index: 4, kind: input, shape index: {}]
  %s5 = inlined_call_operand.vmem [shape: f32[3,1024], index: 5, kind: output, shape index: {}]
  %s6 = sld [smem:[#allocation0]]
  $region53: #{policy_forward.1} parent=0
    _
  %s8 = ssub.s32 1, %s6
  %s9 = scalar_select 0, %s8, %s6
  loop: start=0, step=1, limit=4
  $region2: #{policy_forward.1} parent=0 // loop_pre_header
    _
  $region3: #{policy_forward.1} parent=0 // loop_header
    %s11 = sphi 0, %s15
    %p12 = scmp.ge.s32.totalorder %s11, 4
    %s21 = sphi 0, %s23
    %s24 = sphi 0, %s21
    %s25 = sphi 0, %s24
    %s41 = sphi 0, %s25
    %s45 = sphi 0, %s45
    %s47 = sphi 0, %s45
    %s48 = sphi 0, %s47
    %s62 = sphi 0, %s48
    %s66 = sphi 0, %s66
    %s68 = sphi 0, %s66
    %s69 = sphi 0, %s68
    %s83 = sphi 0, %s69
    %s87 = sphi 0, %s87
    %s89 = sphi 0, %s87
    %s90 = sphi 0, %s89
    %s104 = sphi 0, %s90
    %s108 = sphi 0, %s108
    %s110 = sphi 0, %s108
    %s111 = sphi 0, %s110
    %s125 = sphi 0, %s111
    %s131 = sphi 0, %s133
    %s134 = sphi 0, %s131
    %s135 = sphi 0, %s134
    %s151 = sphi 0, %s135
  $region4: #{policy_forward.1} parent=0 // loop_header_branch
    %14 = sbr.rel (%p12) target = $region8
  $region5: #{policy_forward.1} parent=0 // loop_body
    %s16 = ssub.s32 %s11, 1
    %s17 = ssub.s32 %s11, 2
    %s18 = sadd.s32 %s11, 1
    %s19 = ssub.s32 %s11, %s18
    %p20 = scmp.eq.s32.totalorder %s19, 0
    %s22 = sadd.s32 %s21, 1
    %s23 = scalar_select %p20, %s21, %s22
    %p26 = pneg %p20
    %p27 = scmp.eq.s32.totalorder %s11, 1
    %p28 = por %p26, %p27
    %p29 = scmp.ne.s32.totalorder %s21, %s24
    %p30 = scmp.eq.s32.totalorder %s11, 0
    %p31 = por %p29, %p30
    %p32 = scmp.ne.s32.totalorder %s21, %s24
    %p33 = scmp.eq.s32.totalorder %s16, 1
    %p34 = por %p32, %p33
    %p35 = scmp.ne.s32.totalorder %s24, %s25
    %p36 = scmp.eq.s32.totalorder %s16, 0
    %p37 = por %p35, %p36
    %p38 = scmp.ne.s32.totalorder %s24, %s25
    %p39 = scmp.eq.s32.totalorder %s17, 1
    %p40 = por %p38, %p39
    %p42 = scmp.ne.s32.totalorder %s25, %s41
    %p43 = scmp.eq.s32.totalorder %s17, 0
    %p44 = por %p42, %p43
    %s46 = sadd.s32 %s45, 1
    %p49 = scmp.eq.s32.totalorder %s11, 1
    %p50 = scmp.ne.s32.totalorder %s45, %s47
    %p51 = scmp.eq.s32.totalorder %s11, 0
    %p52 = por %p50, %p51
    %p53 = scmp.ne.s32.totalorder %s45, %s47
    %p54 = scmp.eq.s32.totalorder %s16, 1
    %p55 = por %p53, %p54
    %p56 = scmp.ne.s32.totalorder %s47, %s48
    %p57 = scmp.eq.s32.totalorder %s16, 0
    %p58 = por %p56, %p57
    %p59 = scmp.ne.s32.totalorder %s47, %s48
    %p60 = scmp.eq.s32.totalorder %s17, 1
    %p61 = por %p59, %p60
    %p63 = scmp.ne.s32.totalorder %s48, %s62
    %p64 = scmp.eq.s32.totalorder %s17, 0
    %p65 = por %p63, %p64
    %s67 = sadd.s32 %s66, 1
    %p70 = scmp.eq.s32.totalorder %s11, 1
    %p71 = scmp.ne.s32.totalorder %s66, %s68
    %p72 = scmp.eq.s32.totalorder %s11, 0
    %p73 = por %p71, %p72
    %p74 = scmp.ne.s32.totalorder %s66, %s68
    %p75 = scmp.eq.s32.totalorder %s16, 1
    %p76 = por %p74, %p75
    %p77 = scmp.ne.s32.totalorder %s68, %s69
    %p78 = scmp.eq.s32.totalorder %s16, 0
    %p79 = por %p77, %p78
    %p80 = scmp.ne.s32.totalorder %s68, %s69
    %p81 = scmp.eq.s32.totalorder %s17, 1
    %p82 = por %p80, %p81
    %p84 = scmp.ne.s32.totalorder %s69, %s83
    %p85 = scmp.eq.s32.totalorder %s17, 0
    %p86 = por %p84, %p85
    %s88 = sadd.s32 %s87, 1
    %p91 = scmp.eq.s32.totalorder %s11, 1
    %p92 = scmp.ne.s32.totalorder %s87, %s89
    %p93 = scmp.eq.s32.totalorder %s11, 0
    %p94 = por %p92, %p93
    %p95 = scmp.ne.s32.totalorder %s87, %s89
    %p96 = scmp.eq.s32.totalorder %s16, 1
    %p97 = por %p95, %p96
    %p98 = scmp.ne.s32.totalorder %s89, %s90
    %p99 = scmp.eq.s32.totalorder %s16, 0
    %p100 = por %p98, %p99
    %p101 = scmp.ne.s32.totalorder %s89, %s90
    %p102 = scmp.eq.s32.totalorder %s17, 1
    %p103 = por %p101, %p102
    %p105 = scmp.ne.s32.totalorder %s90, %s104
    %p106 = scmp.eq.s32.totalorder %s17, 0
    %p107 = por %p105, %p106
    %s109 = sadd.s32 %s108, 1
    %p112 = scmp.eq.s32.totalorder %s11, 1
    %p113 = scmp.ne.s32.totalorder %s108, %s110
    %p114 = scmp.eq.s32.totalorder %s11, 0
    %p115 = por %p113, %p114
    %p116 = scmp.ne.s32.totalorder %s108, %s110
    %p117 = scmp.eq.s32.totalorder %s16, 1
    %p118 = por %p116, %p117
    %p119 = scmp.ne.s32.totalorder %s110, %s111
    %p120 = scmp.eq.s32.totalorder %s16, 0
    %p121 = por %p119, %p120
    %p122 = scmp.ne.s32.totalorder %s110, %s111
    %p123 = scmp.eq.s32.totalorder %s17, 1
    %p124 = por %p122, %p123
    %p126 = scmp.ne.s32.totalorder %s111, %s125
    %p127 = scmp.eq.s32.totalorder %s17, 0
    %p128 = por %p126, %p127
    %s129 = ssub.s32 %s11, %s18
    %p130 = scmp.eq.s32.totalorder %s129, 0
    %s132 = sadd.s32 %s131, 1
    %s133 = scalar_select %p130, %s131, %s132
    %p136 = pneg %p130
    %p137 = scmp.eq.s32.totalorder %s11, 1
    %p138 = por %p136, %p137
    %p139 = scmp.ne.s32.totalorder %s131, %s134
    %p140 = scmp.eq.s32.totalorder %s11, 0
    %p141 = por %p139, %p140
    %p142 = scmp.ne.s32.totalorder %s131, %s134
    %p143 = scmp.eq.s32.totalorder %s16, 1
    %p144 = por %p142, %p143
    %p145 = scmp.ne.s32.totalorder %s134, %s135
    %p146 = scmp.eq.s32.totalorder %s16, 0
    %p147 = por %p145, %p146
    %p148 = scmp.ne.s32.totalorder %s134, %s135
    %p149 = scmp.eq.s32.totalorder %s17, 1
    %p150 = por %p148, %p149
    %p152 = scmp.ne.s32.totalorder %s135, %s151
    %p153 = scmp.eq.s32.totalorder %s17, 0
    %p154 = por %p152, %p153
    %p155 = scmp.le.s32.totalorder 1, %s11
    %p156 = scmp.lt.s32.totalorder %s11, 3
    %p157 = pnand %p155, %p156
    %p158 = pneg %p157
    // Predicated region
    $region9: #{policy_forward.1} parent=5 // pred_check
      _
    $region10: #{policy_forward.1} parent=5 // pred_check_branch
      %160 = sbr.rel (%p157) target = $region12
    $region11: #{policy_forward.1} parent=5 // pred_region
      %s161 = ssub.s32 %s11, 1
      // Predicated region
      $region13: #{policy_forward.1} parent=11 // pred_check
        %p162 = pneg %p58
      $region14: #{policy_forward.1} parent=11 // pred_check_branch
        %164 = sbr.rel (%p162) target = $region16
      $region15: #{policy_forward.1} parent=11 // pred_region
        _
      $region16: #{policy_forward.1} parent=11 // pred_fallthru
        _
      // Predicated region
      $region17: #{policy_forward.1} parent=11 // pred_check
        %p165 = pneg %p79
      $region18: #{policy_forward.1} parent=11 // pred_check_branch
        %167 = sbr.rel (%p165) target = $region20
      $region19: #{policy_forward.1} parent=11 // pred_region
        _
      $region20: #{policy_forward.1} parent=11 // pred_fallthru
        _
      // Predicated region
      $region21: #{policy_forward.1} parent=11 // pred_check
        %p168 = pneg %p100
      $region22: #{policy_forward.1} parent=11 // pred_check_branch
        %170 = sbr.rel (%p168) target = $region24
      $region23: #{policy_forward.1} parent=11 // pred_region
        _
      $region24: #{policy_forward.1} parent=11 // pred_fallthru
        _
      // Predicated region
      $region25: #{policy_forward.1} parent=11 // pred_check
        %p171 = pneg %p121
      $region26: #{policy_forward.1} parent=11 // pred_check_branch
        %173 = sbr.rel (%p171) target = $region28
      $region27: #{policy_forward.1} parent=11 // pred_region
        _
      $region28: #{policy_forward.1} parent=11 // pred_fallthru
        _
    $region12: #{policy_forward.1} parent=5 // pred_fallthru
      _
    %p174 = scmp.lt.s32.totalorder %s11, 2
    // Predicated region
    $region29: #{policy_forward.1} parent=5 // pred_check
      %p175 = pneg %p174
    $region30: #{policy_forward.1} parent=5 // pred_check_branch
      %177 = sbr.rel (%p175) target = $region32
    $region31: #{policy_forward.1} parent=5 // pred_region
      // Predicated region
      $region33: #{policy_forward.1} parent=31 // pred_check
        %p178 = pneg %p31
      $region34: #{policy_forward.1} parent=31 // pred_check_branch
        %180 = sbr.rel (%p178) target = $region36
      $region35: #{policy_forward.1} parent=31 // pred_region
        %s181 = smul.u32 4, %s11
        %p182 = scmp.lt.s32.totalorder %s181, 7
        %s183 = scalar_select %p182, %s181, 7
        %s184 = smul.addr %s183, 2
        %s185 = scalar_lea.vmem %s0, %s184
        %s186 = smul.u32 4, %s11
      $region36: #{policy_forward.1} parent=31 // pred_fallthru
        _
    $region32: #{policy_forward.1} parent=5 // pred_fallthru
      _
    %p187 = scmp.le.s32.totalorder 1, %s11
    %p188 = scmp.lt.s32.totalorder %s11, 3
    %p189 = pnand %p187, %p188
    %p190 = pneg %p189
    // Predicated region
    $region37: #{policy_forward.1} parent=5 // pred_check
      _
    $region38: #{policy_forward.1} parent=5 // pred_check_branch
      %192 = sbr.rel (%p189) target = $region40
    $region39: #{policy_forward.1} parent=5 // pred_region
      %s193 = ssub.s32 %s11, 1
      %s194 = smul.u32 4, %s16
      %p195 = scmp.lt.s32.totalorder %s194, 7
      %s196 = scalar_select %p195, %s194, 7
      %s197 = smul.addr %s196, 2
      %s198 = scalar_lea.vmem %s0, %s197
      %p199 = pneg %p37
      %p200 = pneg %p34
      %p201 = pneg %p58
      %p202 = pneg %p55
      %p203 = pneg %p79
      %p204 = pneg %p76
      %p205 = pneg %p100
      %p206 = pneg %p97
      %p207 = pneg %p121
      %p208 = pneg %p118
      %p209 = pneg %p147
      %p210 = pneg %p144
      %s211 = smul.u32 4, %s16
      %p212 = scmp.lt.s32.totalorder %s211, 7
      %s213 = scalar_select %p212, %s211, 7
      %s214 = smul.addr %s213, 4
      %s215 = scalar_lea.vmem %s5, %s214
      %s216 = smul.u32 4, %s16
      %p217 = scmp.lt.s32.totalorder %s216, 7
      %s218 = scalar_select %p217, %s216, 7
      %s219 = smul.addr %s218, 2
      %s220 = scalar_lea.vmem %s0, %s219
      %s221 = smul.u32 4, %s16
      %s222 = smul.u32 4, %s16
      %p223 = scmp.lt.s32.totalorder %s222, 7
      %s224 = scalar_select %p223, %s222, 7
      %s225 = smul.addr %s224, 4
      %s226 = scalar_lea.vmem %s5, %s225
      %s227 = smul.u32 4, %s16
      %v228 = vld [vmem:[%s1] sm:$0xff]
      %v229 = vld [vmem:[%s1 + $0x8] sm:$0xff]
      %v230 = vld [vmem:[%s1 + $0x10] sm:$0xff]
      %v231 = vld [vmem:[%s1 + $0x18] sm:$0xff]
      %v232 = vld [vmem:[%s1 + $0x20] sm:$0xff]
      %v233 = vld [vmem:[%s1 + $0x28] sm:$0xff]
      %v234 = vld [vmem:[%s1 + $0x30] sm:$0xff]
      %v235 = vld [vmem:[%s1 + $0x38] sm:$0xff]
      %v236 = vld [vmem:[%s1 + $0x40] sm:$0xff]
      %v237 = vld [vmem:[%s1 + $0x48] sm:$0xff]
      %v238 = vld [vmem:[%s1 + $0x50] sm:$0xff]
      %v239 = vld [vmem:[%s1 + $0x58] sm:$0xff]
      %v240 = vld [vmem:[%s1 + $0x60] sm:$0xff]
      %v241 = vld [vmem:[%s1 + $0x68] sm:$0xff]
      %v242 = vld [vmem:[%s1 + $0x70] sm:$0xff]
      %v243 = vld [vmem:[%s1 + $0x78] sm:$0xff]
      %v244 = vld [vmem:[%s220] ss:$2 sm:$0xf]
      %246 = vset.pattern.permute.xlu0 0
      %247 = vperm.xlu0 %246, %v228
      %v248 = vpop.permute.xlu0 %247
      %251 = vset.pattern.permute.xlu0 0
      %252 = vperm.xlu0 %251, %v229
      %v253 = vpop.permute.xlu0 %252
      %256 = vset.pattern.permute.xlu0 0
      %257 = vperm.xlu0 %256, %v230
      %v258 = vpop.permute.xlu0 %257
      %261 = vset.pattern.permute.xlu0 0
      %262 = vperm.xlu0 %261, %v231
      %v263 = vpop.permute.xlu0 %262
      %266 = vset.pattern.permute.xlu0 0
      %267 = vperm.xlu0 %266, %v232
      %v268 = vpop.permute.xlu0 %267
      %271 = vset.pattern.permute.xlu0 0
      %272 = vperm.xlu0 %271, %v233
      %v273 = vpop.permute.xlu0 %272
      %276 = vset.pattern.permute.xlu0 0
      %277 = vperm.xlu0 %276, %v234
      %v278 = vpop.permute.xlu0 %277
      %281 = vset.pattern.permute.xlu0 0
      %282 = vperm.xlu0 %281, %v235
      %v283 = vpop.permute.xlu0 %282
      %286 = vset.pattern.permute.xlu0 0
      %287 = vperm.xlu0 %286, %v236
      %v288 = vpop.permute.xlu0 %287
      %291 = vset.pattern.permute.xlu0 0
      %292 = vperm.xlu0 %291, %v237
      %v293 = vpop.permute.xlu0 %292
      %296 = vset.pattern.permute.xlu0 0
      %297 = vperm.xlu0 %296, %v238
      %v298 = vpop.permute.xlu0 %297
      %301 = vset.pattern.permute.xlu0 0
      %302 = vperm.xlu0 %301, %v239
      %v303 = vpop.permute.xlu0 %302
      %306 = vset.pattern.permute.xlu0 0
      %307 = vperm.xlu0 %306, %v240
      %v308 = vpop.permute.xlu0 %307
      %311 = vset.pattern.permute.xlu0 0
      %312 = vperm.xlu0 %311, %v241
      %v313 = vpop.permute.xlu0 %312
      %316 = vset.pattern.permute.xlu0 0
      %317 = vperm.xlu0 %316, %v242
      %v318 = vpop.permute.xlu0 %317
      %321 = vset.pattern.permute.xlu0 0
      %322 = vperm.xlu0 %321, %v243
      %v323 = vpop.permute.xlu0 %322
      %v326 = vlaneseq
      %v327 = vshrl.u32 %v326, 7
      %v328 = vsub.s32 0, %v327
      %v329 = vrot.slane %v244, %v328
      %v330 = vlaneseq
      %v331 = vshrl.u32 %v330, 7
      %v332 = vsub.s32 1, %v331
      %v333 = vrot.slane %v244, %v332
      %v334 = vlaneseq
      %v335 = vshrl.u32 %v334, 7
      %v336 = vsub.s32 2, %v335
      %v337 = vrot.slane %v244, %v336
      %v338 = vlaneseq
      %v339 = vshrl.u32 %v338, 7
      %v340 = vsub.s32 3, %v339
      %v341 = vrot.slane %v244, %v340
      %v346 = vmul.f32 %v248, %v329
      %v347 = vmul.f32 %v248, %v333
      %v348 = vmul.f32 %v248, %v337
      %v349 = vmul.f32 %v248, %v341
      %v350 = vmul.f32 %v253, %v329
      %v351 = vmul.f32 %v253, %v333
      %v352 = vmul.f32 %v253, %v337
      %v353 = vmul.f32 %v253, %v341
      %v354 = vmul.f32 %v258, %v329
      %v355 = vmul.f32 %v258, %v333
      %v356 = vmul.f32 %v258, %v337
      %v357 = vmul.f32 %v258, %v341
      %v358 = vmul.f32 %v263, %v329
      %v359 = vmul.f32 %v263, %v333
      %v360 = vmul.f32 %v263, %v337
      %v361 = vmul.f32 %v263, %v341
      %v362 = vmul.f32 %v268, %v329
      %v363 = vmul.f32 %v268, %v333
      %v364 = vmul.f32 %v268, %v337
      %v365 = vmul.f32 %v268, %v341
      %v366 = vmul.f32 %v273, %v329
      %v367 = vmul.f32 %v273, %v333
      %v368 = vmul.f32 %v273, %v337
      %v369 = vmul.f32 %v273, %v341
      %v370 = vmul.f32 %v278, %v329
      %v371 = vmul.f32 %v278, %v333
      %v372 = vmul.f32 %v278, %v337
      %v373 = vmul.f32 %v278, %v341
      %v374 = vmul.f32 %v283, %v329
      %v375 = vmul.f32 %v283, %v333
      %v376 = vmul.f32 %v283, %v337
      %v377 = vmul.f32 %v283, %v341
      %v378 = vmul.f32 %v288, %v329
      %v379 = vmul.f32 %v288, %v333
      %v380 = vmul.f32 %v288, %v337
      %v381 = vmul.f32 %v288, %v341
      %v382 = vmul.f32 %v293, %v329
      %v383 = vmul.f32 %v293, %v333
      %v384 = vmul.f32 %v293, %v337
      %v385 = vmul.f32 %v293, %v341
      %v386 = vmul.f32 %v298, %v329
      %v387 = vmul.f32 %v298, %v333
      %v388 = vmul.f32 %v298, %v337
      %v389 = vmul.f32 %v298, %v341
      %v390 = vmul.f32 %v303, %v329
      %v391 = vmul.f32 %v303, %v333
      %v392 = vmul.f32 %v303, %v337
      %v393 = vmul.f32 %v303, %v341
      %v394 = vmul.f32 %v308, %v329
      %v395 = vmul.f32 %v308, %v333
      %v396 = vmul.f32 %v308, %v337
      %v397 = vmul.f32 %v308, %v341
      %v398 = vmul.f32 %v313, %v329
      %v399 = vmul.f32 %v313, %v333
      %v400 = vmul.f32 %v313, %v337
      %v401 = vmul.f32 %v313, %v341
      %v402 = vmul.f32 %v318, %v329
      %v403 = vmul.f32 %v318, %v333
      %v404 = vmul.f32 %v318, %v337
      %v405 = vmul.f32 %v318, %v341
      %v406 = vmul.f32 %v323, %v329
      %v407 = vmul.f32 %v323, %v333
      %v408 = vmul.f32 %v323, %v337
      %v409 = vmul.f32 %v323, %v341
      %s410 = scalar_lea.vmem %s220, 1
      %v411 = vld [vmem:[%s410] ss:$2 sm:$0xf]
      %412 = vset.pattern.permute.xlu0 1
      %413 = vperm.xlu0 %412, %v228
      %v414 = vpop.permute.xlu0 %413
      %416 = vset.pattern.permute.xlu0 1
      %417 = vperm.xlu0 %416, %v229
      %v418 = vpop.permute.xlu0 %417
      %420 = vset.pattern.permute.xlu0 1
      %421 = vperm.xlu0 %420, %v230
      %v422 = vpop.permute.xlu0 %421
      %424 = vset.pattern.permute.xlu0 1
      %425 = vperm.xlu0 %424, %v231
      %v426 = vpop.permute.xlu0 %425
      %428 = vset.pattern.permute.xlu0 1
      %429 = vperm.xlu0 %428, %v232
      %v430 = vpop.permute.xlu0 %429
      %432 = vset.pattern.permute.xlu0 1
      %433 = vperm.xlu0 %432, %v233
      %v434 = vpop.permute.xlu0 %433
      %436 = vset.pattern.permute.xlu0 1
      %437 = vperm.xlu0 %436, %v234
      %v438 = vpop.permute.xlu0 %437
      %440 = vset.pattern.permute.xlu0 1
      %441 = vperm.xlu0 %440, %v235
      %v442 = vpop.permute.xlu0 %441
      %444 = vset.pattern.permute.xlu0 1
      %445 = vperm.xlu0 %444, %v236
      %v446 = vpop.permute.xlu0 %445
      %448 = vset.pattern.permute.xlu0 1
      %449 = vperm.xlu0 %448, %v237
      %v450 = vpop.permute.xlu0 %449
      %452 = vset.pattern.permute.xlu0 1
      %453 = vperm.xlu0 %452, %v238
      %v454 = vpop.permute.xlu0 %453
      %456 = vset.pattern.permute.xlu0 1
      %457 = vperm.xlu0 %456, %v239
      %v458 = vpop.permute.xlu0 %457
      %460 = vset.pattern.permute.xlu0 1
      %461 = vperm.xlu0 %460, %v240
      %v462 = vpop.permute.xlu0 %461
      %464 = vset.pattern.permute.xlu0 1
      %465 = vperm.xlu0 %464, %v241
      %v466 = vpop.permute.xlu0 %465
      %468 = vset.pattern.permute.xlu0 1
      %469 = vperm.xlu0 %468, %v242
      %v470 = vpop.permute.xlu0 %469
      %472 = vset.pattern.permute.xlu0 1
      %473 = vperm.xlu0 %472, %v243
      %v474 = vpop.permute.xlu0 %473
      %v477 = vlaneseq
      %v478 = vshrl.u32 %v477, 7
      %v479 = vsub.s32 0, %v478
      %v480 = vrot.slane %v411, %v479
      %v481 = vlaneseq
      %v482 = vshrl.u32 %v481, 7
      %v483 = vsub.s32 1, %v482
      %v484 = vrot.slane %v411, %v483
      %v485 = vlaneseq
      %v486 = vshrl.u32 %v485, 7
      %v487 = vsub.s32 2, %v486
      %v488 = vrot.slane %v411, %v487
      %v489 = vlaneseq
      %v490 = vshrl.u32 %v489, 7
      %v491 = vsub.s32 3, %v490
      %v492 = vrot.slane %v411, %v491
      %v497 = vmul.f32 %v414, %v480
      %v498 = vmul.f32 %v414, %v484
      %v499 = vmul.f32 %v414, %v488
      %v500 = vmul.f32 %v414, %v492
      %v501 = vmul.f32 %v418, %v480
      %v502 = vmul.f32 %v418, %v484
      %v503 = vmul.f32 %v418, %v488
      %v504 = vmul.f32 %v418, %v492
      %v505 = vmul.f32 %v422, %v480
      %v506 = vmul.f32 %v422, %v484
      %v507 = vmul.f32 %v422, %v488
      %v508 = vmul.f32 %v422, %v492
      %v509 = vmul.f32 %v426, %v480
      %v510 = vmul.f32 %v426, %v484
      %v511 = vmul.f32 %v426, %v488
      %v512 = vmul.f32 %v426, %v492
      %v513 = vmul.f32 %v430, %v480
      %v514 = vmul.f32 %v430, %v484
      %v515 = vmul.f32 %v430, %v488
      %v516 = vmul.f32 %v430, %v492
      %v517 = vmul.f32 %v434, %v480
      %v518 = vmul.f32 %v434, %v484
      %v519 = vmul.f32 %v434, %v488
      %v520 = vmul.f32 %v434, %v492
      %v521 = vmul.f32 %v438, %v480
      %v522 = vmul.f32 %v438, %v484
      %v523 = vmul.f32 %v438, %v488
      %v524 = vmul.f32 %v438, %v492
      %v525 = vmul.f32 %v442, %v480
      %v526 = vmul.f32 %v442, %v484
      %v527 = vmul.f32 %v442, %v488
      %v528 = vmul.f32 %v442, %v492
      %v529 = vmul.f32 %v446, %v480
      %v530 = vmul.f32 %v446, %v484
      %v531 = vmul.f32 %v446, %v488
      %v532 = vmul.f32 %v446, %v492
      %v533 = vmul.f32 %v450, %v480
      %v534 = vmul.f32 %v450, %v484
      %v535 = vmul.f32 %v450, %v488
      %v536 = vmul.f32 %v450, %v492
      %v537 = vmul.f32 %v454, %v480
      %v538 = vmul.f32 %v454, %v484
      %v539 = vmul.f32 %v454, %v488
      %v540 = vmul.f32 %v454, %v492
      %v541 = vmul.f32 %v458, %v480
      %v542 = vmul.f32 %v458, %v484
      %v543 = vmul.f32 %v458, %v488
      %v544 = vmul.f32 %v458, %v492
      %v545 = vmul.f32 %v462, %v480
      %v546 = vmul.f32 %v462, %v484
      %v547 = vmul.f32 %v462, %v488
      %v548 = vmul.f32 %v462, %v492
      %v549 = vmul.f32 %v466, %v480
      %v550 = vmul.f32 %v466, %v484
      %v551 = vmul.f32 %v466, %v488
      %v552 = vmul.f32 %v466, %v492
      %v553 = vmul.f32 %v470, %v480
      %v554 = vmul.f32 %v470, %v484
      %v555 = vmul.f32 %v470, %v488
      %v556 = vmul.f32 %v470, %v492
      %v557 = vmul.f32 %v474, %v480
      %v558 = vmul.f32 %v474, %v484
      %v559 = vmul.f32 %v474, %v488
      %v560 = vmul.f32 %v474, %v492
      %v561 = vadd.f32 %v346, %v497
      %v562 = vadd.f32 %v347, %v498
      %v563 = vadd.f32 %v348, %v499
      %v564 = vadd.f32 %v349, %v500
      %v565 = vadd.f32 %v350, %v501
      %v566 = vadd.f32 %v351, %v502
      %v567 = vadd.f32 %v352, %v503
      %v568 = vadd.f32 %v353, %v504
      %v569 = vadd.f32 %v354, %v505
      %v570 = vadd.f32 %v355, %v506
      %v571 = vadd.f32 %v356, %v507
      %v572 = vadd.f32 %v357, %v508
      %v573 = vadd.f32 %v358, %v509
      %v574 = vadd.f32 %v359, %v510
      %v575 = vadd.f32 %v360, %v511
      %v576 = vadd.f32 %v361, %v512
      %v577 = vadd.f32 %v362, %v513
      %v578 = vadd.f32 %v363, %v514
      %v579 = vadd.f32 %v364, %v515
      %v580 = vadd.f32 %v365, %v516
      %v581 = vadd.f32 %v366, %v517
      %v582 = vadd.f32 %v367, %v518
      %v583 = vadd.f32 %v368, %v519
      %v584 = vadd.f32 %v369, %v520
      %v585 = vadd.f32 %v370, %v521
      %v586 = vadd.f32 %v371, %v522
      %v587 = vadd.f32 %v372, %v523
      %v588 = vadd.f32 %v373, %v524
      %v589 = vadd.f32 %v374, %v525
      %v590 = vadd.f32 %v375, %v526
      %v591 = vadd.f32 %v376, %v527
      %v592 = vadd.f32 %v377, %v528
      %v593 = vadd.f32 %v378, %v529
      %v594 = vadd.f32 %v379, %v530
      %v595 = vadd.f32 %v380, %v531
      %v596 = vadd.f32 %v381, %v532
      %v597 = vadd.f32 %v382, %v533
      %v598 = vadd.f32 %v383, %v534
      %v599 = vadd.f32 %v384, %v535
      %v600 = vadd.f32 %v385, %v536
      %v601 = vadd.f32 %v386, %v537
      %v602 = vadd.f32 %v387, %v538
      %v603 = vadd.f32 %v388, %v539
      %v604 = vadd.f32 %v389, %v540
      %v605 = vadd.f32 %v390, %v541
      %v606 = vadd.f32 %v391, %v542
      %v607 = vadd.f32 %v392, %v543
      %v608 = vadd.f32 %v393, %v544
      %v609 = vadd.f32 %v394, %v545
      %v610 = vadd.f32 %v395, %v546
      %v611 = vadd.f32 %v396, %v547
      %v612 = vadd.f32 %v397, %v548
      %v613 = vadd.f32 %v398, %v549
      %v614 = vadd.f32 %v399, %v550
      %v615 = vadd.f32 %v400, %v551
      %v616 = vadd.f32 %v401, %v552
      %v617 = vadd.f32 %v402, %v553
      %v618 = vadd.f32 %v403, %v554
      %v619 = vadd.f32 %v404, %v555
      %v620 = vadd.f32 %v405, %v556
      %v621 = vadd.f32 %v406, %v557
      %v622 = vadd.f32 %v407, %v558
      %v623 = vadd.f32 %v408, %v559
      %v624 = vadd.f32 %v409, %v560
      %v625 = vld [vmem:[%s2] sm:$0xff]
      %v626 = vld [vmem:[%s2 + $0x8] sm:$0xff]
      %v627 = vld [vmem:[%s2 + $0x10] sm:$0xff]
      %v628 = vld [vmem:[%s2 + $0x18] sm:$0xff]
      %v629 = vld [vmem:[%s2 + $0x20] sm:$0xff]
      %v630 = vld [vmem:[%s2 + $0x28] sm:$0xff]
      %v631 = vld [vmem:[%s2 + $0x30] sm:$0xff]
      %v632 = vld [vmem:[%s2 + $0x38] sm:$0xff]
      %v633 = vld [vmem:[%s2 + $0x40] sm:$0xff]
      %v634 = vld [vmem:[%s2 + $0x48] sm:$0xff]
      %v635 = vld [vmem:[%s2 + $0x50] sm:$0xff]
      %v636 = vld [vmem:[%s2 + $0x58] sm:$0xff]
      %v637 = vld [vmem:[%s2 + $0x60] sm:$0xff]
      %v638 = vld [vmem:[%s2 + $0x68] sm:$0xff]
      %v639 = vld [vmem:[%s2 + $0x70] sm:$0xff]
      %v640 = vld [vmem:[%s2 + $0x78] sm:$0xff]
      %642 = vset.pattern.permute.xlu0 0
      %643 = vperm.xlu0 %642, %v625
      %v644 = vpop.permute.xlu0 %643
      %647 = vset.pattern.permute.xlu0 0
      %648 = vperm.xlu0 %647, %v626
      %v649 = vpop.permute.xlu0 %648
      %652 = vset.pattern.permute.xlu0 0
      %653 = vperm.xlu0 %652, %v627
      %v654 = vpop.permute.xlu0 %653
      %657 = vset.pattern.permute.xlu0 0
      %658 = vperm.xlu0 %657, %v628
      %v659 = vpop.permute.xlu0 %658
      %662 = vset.pattern.permute.xlu0 0
      %663 = vperm.xlu0 %662, %v629
      %v664 = vpop.permute.xlu0 %663
      %667 = vset.pattern.permute.xlu0 0
      %668 = vperm.xlu0 %667, %v630
      %v669 = vpop.permute.xlu0 %668
      %672 = vset.pattern.permute.xlu0 0
      %673 = vperm.xlu0 %672, %v631
      %v674 = vpop.permute.xlu0 %673
      %677 = vset.pattern.permute.xlu0 0
      %678 = vperm.xlu0 %677, %v632
      %v679 = vpop.permute.xlu0 %678
      %682 = vset.pattern.permute.xlu0 0
      %683 = vperm.xlu0 %682, %v633
      %v684 = vpop.permute.xlu0 %683
      %687 = vset.pattern.permute.xlu0 0
      %688 = vperm.xlu0 %687, %v634
      %v689 = vpop.permute.xlu0 %688
      %692 = vset.pattern.permute.xlu0 0
      %693 = vperm.xlu0 %692, %v635
      %v694 = vpop.permute.xlu0 %693
      %697 = vset.pattern.permute.xlu0 0
      %698 = vperm.xlu0 %697, %v636
      %v699 = vpop.permute.xlu0 %698
      %702 = vset.pattern.permute.xlu0 0
      %703 = vperm.xlu0 %702, %v637
      %v704 = vpop.permute.xlu0 %703
      %707 = vset.pattern.permute.xlu0 0
      %708 = vperm.xlu0 %707, %v638
      %v709 = vpop.permute.xlu0 %708
      %712 = vset.pattern.permute.xlu0 0
      %713 = vperm.xlu0 %712, %v639
      %v714 = vpop.permute.xlu0 %713
      %717 = vset.pattern.permute.xlu0 0
      %718 = vperm.xlu0 %717, %v640
      %v719 = vpop.permute.xlu0 %718
      %v721 = vadd.f32 %v561, %v644
      %v722 = vadd.f32 %v562, %v644
      %v723 = vadd.f32 %v563, %v644
      %v724 = vadd.f32 %v564, %v644
      %v725 = vadd.f32 %v565, %v649
      %v726 = vadd.f32 %v566, %v649
      %v727 = vadd.f32 %v567, %v649
      %v728 = vadd.f32 %v568, %v649
      %v729 = vadd.f32 %v569, %v654
      %v730 = vadd.f32 %v570, %v654
      %v731 = vadd.f32 %v571, %v654
      %v732 = vadd.f32 %v572, %v654
      %v733 = vadd.f32 %v573, %v659
      %v734 = vadd.f32 %v574, %v659
      %v735 = vadd.f32 %v575, %v659
      %v736 = vadd.f32 %v576, %v659
      %v737 = vadd.f32 %v577, %v664
      %v738 = vadd.f32 %v578, %v664
      %v739 = vadd.f32 %v579, %v664
      %v740 = vadd.f32 %v580, %v664
      %v741 = vadd.f32 %v581, %v669
      %v742 = vadd.f32 %v582, %v669
      %v743 = vadd.f32 %v583, %v669
      %v744 = vadd.f32 %v584, %v669
      %v745 = vadd.f32 %v585, %v674
      %v746 = vadd.f32 %v586, %v674
      %v747 = vadd.f32 %v587, %v674
      %v748 = vadd.f32 %v588, %v674
      %v749 = vadd.f32 %v589, %v679
      %v750 = vadd.f32 %v590, %v679
      %v751 = vadd.f32 %v591, %v679
      %v752 = vadd.f32 %v592, %v679
      %v753 = vadd.f32 %v593, %v684
      %v754 = vadd.f32 %v594, %v684
      %v755 = vadd.f32 %v595, %v684
      %v756 = vadd.f32 %v596, %v684
      %v757 = vadd.f32 %v597, %v689
      %v758 = vadd.f32 %v598, %v689
      %v759 = vadd.f32 %v599, %v689
      %v760 = vadd.f32 %v600, %v689
      %v761 = vadd.f32 %v601, %v694
      %v762 = vadd.f32 %v602, %v694
      %v763 = vadd.f32 %v603, %v694
      %v764 = vadd.f32 %v604, %v694
      %v765 = vadd.f32 %v605, %v699
      %v766 = vadd.f32 %v606, %v699
      %v767 = vadd.f32 %v607, %v699
      %v768 = vadd.f32 %v608, %v699
      %v769 = vadd.f32 %v609, %v704
      %v770 = vadd.f32 %v610, %v704
      %v771 = vadd.f32 %v611, %v704
      %v772 = vadd.f32 %v612, %v704
      %v773 = vadd.f32 %v613, %v709
      %v774 = vadd.f32 %v614, %v709
      %v775 = vadd.f32 %v615, %v709
      %v776 = vadd.f32 %v616, %v709
      %v777 = vadd.f32 %v617, %v714
      %v778 = vadd.f32 %v618, %v714
      %v779 = vadd.f32 %v619, %v714
      %v780 = vadd.f32 %v620, %v714
      %v781 = vadd.f32 %v621, %v719
      %v782 = vadd.f32 %v622, %v719
      %v783 = vadd.f32 %v623, %v719
      %v784 = vadd.f32 %v624, %v719
      %v785 = vmax.f32 %v721, 0.0
      %v786 = vmax.f32 %v722, 0.0
      %v787 = vmax.f32 %v723, 0.0
      %v788 = vmax.f32 %v724, 0.0
      %v789 = vmax.f32 %v725, 0.0
      %v790 = vmax.f32 %v726, 0.0
      %v791 = vmax.f32 %v727, 0.0
      %v792 = vmax.f32 %v728, 0.0
      %v793 = vmax.f32 %v729, 0.0
      %v794 = vmax.f32 %v730, 0.0
      %v795 = vmax.f32 %v731, 0.0
      %v796 = vmax.f32 %v732, 0.0
      %v797 = vmax.f32 %v733, 0.0
      %v798 = vmax.f32 %v734, 0.0
      %v799 = vmax.f32 %v735, 0.0
      %v800 = vmax.f32 %v736, 0.0
      %v801 = vmax.f32 %v737, 0.0
      %v802 = vmax.f32 %v738, 0.0
      %v803 = vmax.f32 %v739, 0.0
      %v804 = vmax.f32 %v740, 0.0
      %v805 = vmax.f32 %v741, 0.0
      %v806 = vmax.f32 %v742, 0.0
      %v807 = vmax.f32 %v743, 0.0
      %v808 = vmax.f32 %v744, 0.0
      %v809 = vmax.f32 %v745, 0.0
      %v810 = vmax.f32 %v746, 0.0
      %v811 = vmax.f32 %v747, 0.0
      %v812 = vmax.f32 %v748, 0.0
      %v813 = vmax.f32 %v749, 0.0
      %v814 = vmax.f32 %v750, 0.0
      %v815 = vmax.f32 %v751, 0.0
      %v816 = vmax.f32 %v752, 0.0
      %v817 = vmax.f32 %v753, 0.0
      %v818 = vmax.f32 %v754, 0.0
      %v819 = vmax.f32 %v755, 0.0
      %v820 = vmax.f32 %v756, 0.0
      %v821 = vmax.f32 %v757, 0.0
      %v822 = vmax.f32 %v758, 0.0
      %v823 = vmax.f32 %v759, 0.0
      %v824 = vmax.f32 %v760, 0.0
      %v825 = vmax.f32 %v761, 0.0
      %v826 = vmax.f32 %v762, 0.0
      %v827 = vmax.f32 %v763, 0.0
      %v828 = vmax.f32 %v764, 0.0
      %v829 = vmax.f32 %v765, 0.0
      %v830 = vmax.f32 %v766, 0.0
      %v831 = vmax.f32 %v767, 0.0
      %v832 = vmax.f32 %v768, 0.0
      %v833 = vmax.f32 %v769, 0.0
      %v834 = vmax.f32 %v770, 0.0
      %v835 = vmax.f32 %v771, 0.0
      %v836 = vmax.f32 %v772, 0.0
      %v837 = vmax.f32 %v773, 0.0
      %v838 = vmax.f32 %v774, 0.0
      %v839 = vmax.f32 %v775, 0.0
      %v840 = vmax.f32 %v776, 0.0
      %v841 = vmax.f32 %v777, 0.0
      %v842 = vmax.f32 %v778, 0.0
      %v843 = vmax.f32 %v779, 0.0
      %v844 = vmax.f32 %v780, 0.0
      %v845 = vmax.f32 %v781, 0.0
      %v846 = vmax.f32 %v782, 0.0
      %v847 = vmax.f32 %v783, 0.0
      %v848 = vmax.f32 %v784, 0.0
      %v849 = vld [vmem:[%s3] sm:$0x7]
      %v850 = vld [vmem:[%s4] sm:$0x7]
      %852 = vset.pattern.permute.xlu0 0
      %853 = vperm.xlu0 %852, %v850
      %v854 = vpop.permute.xlu0 %853
      %856 = vmatprep.subr.mxu0 %v786
      %857 = vmatpush1.msra.mxu0 %v785
      %858 = vmatprep.subr.mxu0 %v790
      %859 = vmatpush1.msra.mxu0 %v789
      %860 = vmatprep.subr.mxu0 %v794
      %861 = vmatpush1.msra.mxu0 %v793
      %862 = vmatprep.subr.mxu0 %v798
      %863 = vmatpush1.msra.mxu0 %v797
      %864 = vmatprep.subr.mxu0 %v802
      %865 = vmatpush1.msra.mxu0 %v801
      %866 = vmatprep.subr.mxu0 %v806
      %867 = vmatpush1.msra.mxu0 %v805
      %868 = vmatprep.subr.mxu0 %v810
      %869 = vmatpush1.msra.mxu0 %v809
      %870 = vmatprep.subr.mxu0 %v814
      %871 = vmatpush1.msra.mxu0 %v813
      %872 = vmatprep.subr.mxu0 %v818
      %873 = vmatpush1.msra.mxu0 %v817
      %874 = vmatprep.subr.mxu0 %v822
      %875 = vmatpush1.msra.mxu0 %v821
      %876 = vmatprep.subr.mxu0 %v826
      %877 = vmatpush1.msra.mxu0 %v825
      %878 = vmatprep.subr.mxu0 %v830
      %879 = vmatpush1.msra.mxu0 %v829
      %880 = vmatprep.subr.mxu0 %v834
      %881 = vmatpush1.msra.mxu0 %v833
      %882 = vmatprep.subr.mxu0 %v838
      %883 = vmatpush1.msra.mxu0 %v837
      %884 = vmatprep.subr.mxu0 %v842
      %885 = vmatpush1.msra.mxu0 %v841
      %886 = vmatprep.subr.mxu0 %v846
      %887 = vmatpush1.msra.mxu0 %v845
      %888 = vmatprep.subr.mxu0 0.0
      %889 = vmatpush1.msra.mxu0 0.0
      %890 = vmatprep.subr.mxu0 0.0
      %891 = vmatpush1.msra.mxu0 0.0
      %892 = vmatprep.subr.mxu0 0.0
      %893 = vmatpush1.msra.mxu0 0.0
      %894 = vmatprep.subr.mxu0 0.0
      %895 = vmatpush1.msra.mxu0 0.0
      %896 = vmatprep.subr.mxu0 0.0
      %897 = vmatpush1.msra.mxu0 0.0
      %898 = vmatprep.subr.mxu0 0.0
      %899 = vmatpush1.msra.mxu0 0.0
      %900 = vmatprep.subr.mxu0 0.0
      %901 = vmatpush1.msra.mxu0 0.0
      %902 = vmatprep.subr.mxu0 0.0
      %903 = vmatpush1.msra.mxu0 0.0
      %904 = vmatprep.subr.mxu0 0.0
      %905 = vmatpush1.msra.mxu0 0.0
      %906 = vmatprep.subr.mxu0 0.0
      %907 = vmatpush1.msra.mxu0 0.0
      %908 = vmatprep.subr.mxu0 0.0
      %909 = vmatpush1.msra.mxu0 0.0
      %910 = vmatprep.subr.mxu0 0.0
      %911 = vmatpush1.msra.mxu0 0.0
      %912 = vmatprep.subr.mxu0 0.0
      %913 = vmatpush1.msra.mxu0 0.0
      %914 = vmatprep.subr.mxu0 0.0
      %915 = vmatpush1.msra.mxu0 0.0
      %916 = vmatprep.subr.mxu0 0.0
      %917 = vmatpush1.msra.mxu0 0.0
      %918 = vmatprep.subr.mxu0 0.0
      %919 = vmatpush1.msra.mxu0 0.0
      %920 = vmatprep.mubr.f32.mxu0 0.0
      %921 = vmatmul.mubr.f32.gmra.mrb[0].mxu0 %v849
      %v922 = vpop.f32.mrb[0].mxu0
      %v923 = vadd.f32 %v854, %v922
      %v924 = vpop.f32.mrb[0].mxu0
      %v925 = vadd.f32 %v854, %v924
      %926 = vdwg.mxu0
      %927 = vmatprep.subr.mxu0 %v788
      %928 = vmatpush1.msra.mxu0 %v787
      %929 = vmatprep.subr.mxu0 %v792
      %930 = vmatpush1.msra.mxu0 %v791
      %931 = vmatprep.subr.mxu0 %v796
      %932 = vmatpush1.msra.mxu0 %v795
      %933 = vmatprep.subr.mxu0 %v800
      %934 = vmatpush1.msra.mxu0 %v799
      %935 = vmatprep.subr.mxu0 %v804
      %936 = vmatpush1.msra.mxu0 %v803
      %937 = vmatprep.subr.mxu0 %v808
      %938 = vmatpush1.msra.mxu0 %v807
      %939 = vmatprep.subr.mxu0 %v812
      %940 = vmatpush1.msra.mxu0 %v811
      %941 = vmatprep.subr.mxu0 %v816
      %942 = vmatpush1.msra.mxu0 %v815
      %943 = vmatprep.subr.mxu0 %v820
      %944 = vmatpush1.msra.mxu0 %v819
      %945 = vmatprep.subr.mxu0 %v824
      %946 = vmatpush1.msra.mxu0 %v823
      %947 = vmatprep.subr.mxu0 %v828
      %948 = vmatpush1.msra.mxu0 %v827
      %949 = vmatprep.subr.mxu0 %v832
      %950 = vmatpush1.msra.mxu0 %v831
      %951 = vmatprep.subr.mxu0 %v836
      %952 = vmatpush1.msra.mxu0 %v835
      %953 = vmatprep.subr.mxu0 %v840
      %954 = vmatpush1.msra.mxu0 %v839
      %955 = vmatprep.subr.mxu0 %v844
      %956 = vmatpush1.msra.mxu0 %v843
      %957 = vmatprep.subr.mxu0 %v848
      %958 = vmatpush1.msra.mxu0 %v847
      %959 = vmatprep.subr.mxu0 0.0
      %960 = vmatpush1.msra.mxu0 0.0
      %961 = vmatprep.subr.mxu0 0.0
      %962 = vmatpush1.msra.mxu0 0.0
      %963 = vmatprep.subr.mxu0 0.0
      %964 = vmatpush1.msra.mxu0 0.0
      %965 = vmatprep.subr.mxu0 0.0
      %966 = vmatpush1.msra.mxu0 0.0
      %967 = vmatprep.subr.mxu0 0.0
      %968 = vmatpush1.msra.mxu0 0.0
      %969 = vmatprep.subr.mxu0 0.0
      %970 = vmatpush1.msra.mxu0 0.0
      %971 = vmatprep.subr.mxu0 0.0
      %972 = vmatpush1.msra.mxu0 0.0
      %973 = vmatprep.subr.mxu0 0.0
      %974 = vmatpush1.msra.mxu0 0.0
      %975 = vmatprep.subr.mxu0 0.0
      %976 = vmatpush1.msra.mxu0 0.0
      %977 = vmatprep.subr.mxu0 0.0
      %978 = vmatpush1.msra.mxu0 0.0
      %979 = vmatprep.subr.mxu0 0.0
      %980 = vmatpush1.msra.mxu0 0.0
      %981 = vmatprep.subr.mxu0 0.0
      %982 = vmatpush1.msra.mxu0 0.0
      %983 = vmatprep.subr.mxu0 0.0
      %984 = vmatpush1.msra.mxu0 0.0
      %985 = vmatprep.subr.mxu0 0.0
      %986 = vmatpush1.msra.mxu0 0.0
      %987 = vmatprep.subr.mxu0 0.0
      %988 = vmatpush1.msra.mxu0 0.0
      %989 = vmatprep.subr.mxu0 0.0
      %990 = vmatpush1.msra.mxu0 0.0
      %991 = vmatprep.mubr.f32.mxu0 0.0
      %992 = vmatmul.mubr.f32.gmra.mrb[0].mxu0 %v849
      %v993 = vpop.f32.mrb[0].mxu0
      %v994 = vadd.f32 %v854, %v993
      %v995 = vpop.f32.mrb[0].mxu0
      %v996 = vadd.f32 %v854, %v995
      %997 = vdwg.mxu0
      %v1002 = vcombine.low %v923, %v925
      %v1003 = vcombine.low %v994, %v996
      %1006 = vst [vmem:[%s226] sm:$0x77] %v1002
      %1007 = vst [vmem:[%s226 + $0x8] sm:$0x77] %v1003
      %s1008 = smul.u32 4, %s16
      %p1009 = scmp.lt.s32.totalorder %s1008, 7
      %s1010 = scalar_select %p1009, %s1008, 7
      %s1011 = smul.addr %s1010, 4
      %s1012 = scalar_lea.vmem %s5, %s1011
      // Predicated region
      $region41: #{policy_forward.1} parent=39 // pred_check
        %p1013 = pneg %p144
      $region42: #{policy_forward.1} parent=39 // pred_check_branch
        %1015 = sbr.rel (%p1013) target = $region44
      $region43: #{policy_forward.1} parent=39 // pred_region
        %s1016 = smul.u32 4, %s16
      $region44: #{policy_forward.1} parent=39 // pred_fallthru
        _
    $region40: #{policy_forward.1} parent=5 // pred_fallthru
      _
    %p1017 = scmp.le.s32.totalorder 2, %s11
    // Predicated region
    $region45: #{policy_forward.1} parent=5 // pred_check
      %p1018 = pneg %p1017
    $region46: #{policy_forward.1} parent=5 // pred_check_branch
      %1020 = sbr.rel (%p1018) target = $region48
    $region47: #{policy_forward.1} parent=5 // pred_region
      %s1021 = ssub.s32 %s11, 2
      // Predicated region
      $region49: #{policy_forward.1} parent=47 // pred_check
        %p1022 = pneg %p150
      $region50: #{policy_forward.1} parent=47 // pred_check_branch
        %1024 = sbr.rel (%p1022) target = $region52
      $region51: #{policy_forward.1} parent=47 // pred_region
        %s1025 = smul.u32 4, %s17
        %p1026 = scmp.lt.s32.totalorder %s1025, 7
        %s1027 = scalar_select %p1026, %s1025, 7
        %s1028 = smul.addr %s1027, 4
        %s1029 = scalar_lea.vmem %s5, %s1028
      $region52: #{policy_forward.1} parent=47 // pred_fallthru
        _
    $region48: #{policy_forward.1} parent=5 // pred_fallthru
      _
  $region6: #{policy_forward.1} parent=0 // loop_footer
    %s15 = sadd.s32 1, %s11
  $region7: #{policy_forward.1} parent=0 // loop_footer_branch
    %10 = sbr.rel target = $region3
  $region8: #{policy_forward.1} parent=0 // loop_exit
    _

</llo_original>
